<compile_context>
chip_gen: v6e
topology: v6e:2x2x1
jax: 0.10.0
libtpu: 0.0.40
codegen_flags: <defaults>
</compile_context>

<pallas_src>
import jax
import jax.numpy as jnp
from jax.experimental import pallas as pl
from jax.experimental.pallas import tpu as pltpu


# ----------------------------------------------------------------------------
# Kernel
# ----------------------------------------------------------------------------
def _attention_kernel(g_ref, x_ref, wg_ref, wx_ref, wgl_ref,
                      bgx_ref, bgl_ref, wpsi_ref, bpsi_ref, out_ref):
    # g_ref / x_ref / out_ref : (bn, Cin, tm)  -- pixels on the lane axis
    # wg/wx/wgl               : (Cout_p, Cin)  (BN folded, activation dtype)
    # bgx (=bg+bx), bgl       : (Cout_p, 1)    f32
    # wpsi                    : (1, Cout_p)    f32
    # bpsi                    : (1, 1)         f32
    f32 = jnp.float32
    wg, wx, wgl = wg_ref[...], wx_ref[...], wgl_ref[...]
    bgx, bgl = bgx_ref[...], bgl_ref[...]
    wpsi, bpsi = wpsi_ref[...], bpsi_ref[...]

    bn = g_ref.shape[0]
    for b in range(bn):                       # bn is a small, static block dim
        gb = g_ref[b]                         # (Cin, tm), native dtype
        xb = x_ref[b]
        # Fused per-pixel 1x1 convs (channel matmuls), f32 accumulation.
        gx = (jnp.dot(wg, gb, preferred_element_type=f32)
              + jnp.dot(wx, xb, preferred_element_type=f32)
              + bgx)                                              # g1 + x1
        gc = jnp.maximum(
            jnp.dot(wgl, xb, preferred_element_type=f32) + bgl, 0.0)
        p = jnp.maximum(gx + gc, 0.0)                             # (Cout_p, tm)
        # psi = Sigmoid(BN(Conv1x1(p, Cout -> 1)))   (BN folded)
        logits = jnp.dot(wpsi, p, preferred_element_type=f32) + bpsi
        psi = jax.nn.sigmoid(logits)                              # (1, tm) f32
        out_ref[b] = (xb * psi.astype(xb.dtype)).astype(out_ref.dtype)


# ----------------------------------------------------------------------------
# Tile / VMEM budgeting
# ----------------------------------------------------------------------------
def _round_up(v, m):
    return (v + m - 1) // m * m


def _vmem_capacity_bytes():
    """Physical VMEM per TensorCore, with a conservative fallback."""
    try:
        return int(pltpu.get_tpu_info().vmem_capacity_bytes)
    except Exception:
        pass
    try:
        kind = jax.devices()[0].device_kind.lower()
    except Exception:
        kind = ""
    if "v7" in kind:
        return 64 << 20
    if any(v in kind for v in ("v4", "v5", "v6")):
        return 128 << 20
    return 64 << 20        # unknown -> conservative


def _largest_divisor_leq(n, cap):
    best = 1
    for d in range(1, n + 1):
        if n % d == 0 and d <= cap:
            best = d
    return best


def _largest_lane_tile(hw_pad, cap):
    """Largest multiple of 128 dividing hw_pad that is <= cap (>= 128)."""
    best, t = 128, 128
    while t <= hw_pad:
        if hw_pad % t == 0 and t <= cap:
            best = t
        t += 128
    return best


def _choose_tiling(N, Cin, HW_pad, itemsize, block_budget,
                   target_step_bytes, min_grid_steps):
    pack = max(1, 4 // itemsize)              # sub-32-bit packs along sublanes
    cin_pad = _round_up(Cin, 8 * pack)        # sublane-padded channel rows
    # pixels/step targeted by HBM traffic (g + x + out streams)
    tgt_pix = max(128, target_step_bytes // (3 * Cin * itemsize))
    # pixels/step allowed by scoped VMEM (double-buffered, 3 streams, padded)
    vmem_pix = max(128, block_budget // (2 * 3 * cin_pad * itemsize))
    pix = min(tgt_pix, vmem_pix)
    # keep >= min_grid_steps grid steps when possible (megacore + pipelining)
    total_pix = N * HW_pad
    if total_pix // pix < min_grid_steps:
        pix = max(128, total_pix // min_grid_steps)
    if pix >= HW_pad:
        bn = _largest_divisor_leq(N, max(1, pix // HW_pad))
        tm = HW_pad
    else:
        bn = 1
        tm = _largest_lane_tile(HW_pad, pix)
    return bn, tm


# ----------------------------------------------------------------------------
# Wrapper
# ----------------------------------------------------------------------------
def attention_block(g, x, params, *, target_step_bytes=2 << 20,
                    min_grid_steps=4):
    """g, x: (N, Cin, H, W) NCHW (like PyTorch). Returns (N, Cin, H, W)."""
    N, Cin, H, W = x.shape
    # TODO(synk): the reference's bilinear interpolate is identity only when g
    # and x share spatial dims; a general resize path is not implemented.
    assert g.shape == x.shape
    HW = H * W
    act_dtype = x.dtype
    itemsize = jnp.dtype(act_dtype).itemsize
    Cout = params["wg"].shape[0]
    Cout_p = _round_up(Cout, 8)               # keep intermediates sublane-tiled

    # ---- host-side parameter packing (tiny) --------------------------------
    def pad_rows(w, b):
        if Cout_p != Cout:
            w = jnp.pad(w, ((0, Cout_p - Cout), (0, 0)))
            b = jnp.pad(b, ((0, Cout_p - Cout),))
        return w, b

    wg, bg = pad_rows(params["wg"], params["bg"])
    wx, bx = pad_rows(params["wx"], params["bx"])
    wgl, bgl = pad_rows(params["wgl"], params["bgl"])
    wpsi = params["wpsi"].reshape(1, Cout)
    if Cout_p != Cout:
        wpsi = jnp.pad(wpsi, ((0, 0), (0, Cout_p - Cout)))

    wg = wg.astype(act_dtype)
    wx = wx.astype(act_dtype)
    wgl = wgl.astype(act_dtype)
    bgx = (bg + bx).reshape(Cout_p, 1).astype(jnp.float32)
    bglc = bgl.reshape(Cout_p, 1).astype(jnp.float32)
    wpsi = wpsi.astype(jnp.float32)
    bpsi = params["bpsi"].reshape(1, 1).astype(jnp.float32)

    # ---- NCHW -> (N, Cin, HW) view; pad HW to a lane multiple --------------
    HW_pad = _round_up(HW, 128)
    g3 = g.reshape(N, Cin, HW)
    x3 = x.reshape(N, Cin, HW)
    if HW_pad != HW:
        pad = ((0, 0), (0, 0), (0, HW_pad - HW))
        g3 = jnp.pad(g3, pad)
        x3 = jnp.pad(x3, pad)

    # ---- per-generation VMEM budget & tile selection ------------------------
    vmem_cap = _vmem_capacity_bytes()
    vmem_limit = min(vmem_cap * 3 // 4, 112 << 20)      # 48 MiB v7x, 96 MiB v6e
    weight_bytes = ((wg.size + wx.size + wgl.size) * itemsize
                    + (bgx.size + bglc.size + wpsi.size + bpsi.size) * 4)
    block_budget = max(1 << 20, vmem_limit // 2 - 4 * weight_bytes)
    bn, tm = _choose_tiling(N, Cin, HW_pad, itemsize, block_budget,
                            target_step_bytes, min_grid_steps)
    grid = (N // bn, HW_pad // tm)

    pix_spec = pl.BlockSpec((bn, Cin, tm), lambda i, j: (i, 0, j))
    wspec = lambda *shape: pl.BlockSpec(shape, lambda i, j: (0, 0))

    M = N * HW
    cost = pl.CostEstimate(
        flops=int(M * (6 * Cout_p * Cin + 7 * Cout_p + 2 * Cin)),
        transcendentals=int(2 * M),                       # sigmoid ~ exp + recip
        bytes_accessed=int(3 * M * Cin * itemsize + weight_bytes),
    )

    out3 = pl.pallas_call(
        _attention_kernel,
        out_shape=jax.ShapeDtypeStruct((N, Cin, HW_pad), act_dtype),
        grid_spec=pltpu.PrefetchScalarGridSpec(
            num_scalar_prefetch=0,
            grid=grid,
            in_specs=[
                pix_spec,                      # g   (bn, Cin, tm)
                pix_spec,                      # x   (bn, Cin, tm)
                wspec(Cout_p, Cin),            # Wg  (BN folded)
                wspec(Cout_p, Cin),            # Wx
                wspec(Cout_p, Cin),            # Wgl
                wspec(Cout_p, 1),              # bg + bx
                wspec(Cout_p, 1),              # bgl
                wspec(1, Cout_p),              # Wpsi
                wspec(1, 1),                   # bpsi
            ],
            out_specs=pix_spec,
        ),
        compiler_params=pltpu.CompilerParams(
            dimension_semantics=("parallel", "parallel"),
            vmem_limit_bytes=int(vmem_limit)),
        cost_estimate=cost,
    )(g3, x3, wg, wx, wgl, bgx, bglc, wpsi, bpsi)

    if HW_pad != HW:
        out3 = out3[:, :, :HW]
    return out3.reshape(N, Cin, H, W)


# ----------------------------------------------------------------------------
# Parameters (BN folded) + pure-JAX reference
# ----------------------------------------------------------------------------
def _fold_bn(w, b, gamma, beta, mean, var, eps=1e-5):
    """Fold eval-mode BatchNorm into a 1x1 conv. w: (Cout, Cin), b: (Cout,)."""
    scale = gamma / jnp.sqrt(var + eps)
    w_f = w * scale[:, None]
    b_f = (b - mean) * scale + beta
    return w_f.astype(jnp.float32), b_f.astype(jnp.float32)


def make_params(key, in_channels, out_channels):
    keys = jax.random.split(key, 24)
    ki = iter(range(24))

    def conv_bn(cin, cout):
        w = 0.1 * jax.random.normal(keys[next(ki)], (cout, cin), jnp.float32)
        b = 0.1 * jax.random.normal(keys[next(ki)], (cout,), jnp.float32)
        gamma = 1.0 + 0.1 * jax.random.normal(keys[next(ki)], (cout,), jnp.float32)
        beta = 0.1 * jax.random.normal(keys[next(ki)], (cout,), jnp.float32)
        mean = 0.1 * jax.random.normal(keys[next(ki)], (cout,), jnp.float32)
        var = jnp.abs(1.0 + 0.1 * jax.random.normal(keys[next(ki)], (cout,),
                                                    jnp.float32))
        return _fold_bn(w, b, gamma, beta, mean, var)

    wg, bg = conv_bn(in_channels, out_channels)
    wx, bx = conv_bn(in_channels, out_channels)
    wgl, bgl = conv_bn(in_channels, out_channels)
    wpsi, bpsi = conv_bn(out_channels, 1)
    return dict(wg=wg, bg=bg, wx=wx, bx=bx, wgl=wgl, bgl=bgl,
                wpsi=wpsi, bpsi=bpsi)


def attention_block_ref(g, x, p):
    """Pure-JAX reference (same math) for a correctness check."""
    N, Cin, H, W = x.shape
    gf = jnp.transpose(g, (0, 2, 3, 1)).reshape(-1, Cin)
    xf = jnp.transpose(x, (0, 2, 3, 1)).reshape(-1, Cin)
    g1 = gf @ p["wg"].T + p["bg"]
    x1 = xf @ p["wx"].T + p["bx"]
    gc = jnp.maximum(xf @ p["wgl"].T + p["bgl"], 0.0)
    a = jnp.maximum(g1 + x1 + gc, 0.0)
    psi = jax.nn.sigmoid(a @ p["wpsi"].T + p["bpsi"])
    out = xf * psi
    return jnp.transpose(out.reshape(N, H, W, Cin), (0, 3, 1, 2))


if __name__ == "__main__":
    in_channels, out_channels = 4, 8
    N, H, W = 2, 16, 16

    key = jax.random.PRNGKey(0)
    kg, kx, kp = jax.random.split(key, 3)
    g = jax.random.normal(kg, (N, in_channels, H, W), jnp.float32)
    x = jax.random.normal(kx, (N, in_channels, H, W), jnp.float32)
    params = make_params(kp, in_channels, out_channels)

    out = attention_block(g, x, params)
    out = jax.block_until_ready(out)

    ref = attention_block_ref(g, x, params)
    assert out.shape == (N, in_channels, H, W)
    assert jnp.allclose(out, ref, atol=1e-4, rtol=1e-4), "mismatch vs reference"

    print("KERNEL_OK")
</pallas_src>

<mosaic_0001>
module attributes {stable_mosaic.version = 11 : i64} {
  func.func @_attention_kernel(%arg0: i32, %arg1: i32, %arg2: memref<1x4x128xf32, #tpu.memory_space<vmem>>, %arg3: memref<1x4x128xf32, #tpu.memory_space<vmem>>, %arg4: memref<8x4xf32, #tpu.memory_space<vmem>>, %arg5: memref<8x4xf32, #tpu.memory_space<vmem>>, %arg6: memref<8x4xf32, #tpu.memory_space<vmem>>, %arg7: memref<8x1xf32, #tpu.memory_space<vmem>>, %arg8: memref<8x1xf32, #tpu.memory_space<vmem>>, %arg9: memref<1x8xf32, #tpu.memory_space<vmem>>, %arg10: memref<1x1xf32, #tpu.memory_space<vmem>>, %arg11: memref<1x4x128xf32, #tpu.memory_space<vmem>>) attributes {dimension_semantics = [#tpu.dimension_semantics<parallel>, #tpu.dimension_semantics<parallel>], iteration_bounds = array<i64: 2, 2>, scalar_prefetch = 0 : i64, scratch_operands = 0 : i64, tpu.core_type = #tpu.core_type<tc>, window_params = [{transform_indices = @transform_0, window_bounds = array<i64: 1, 4, 128>}, {transform_indices = @transform_1, window_bounds = array<i64: 1, 4, 128>}, {pipeline_mode = #tpu.pipeline_mode<synchronous>, transform_indices = @transform_2, window_bounds = array<i64: 8, 4>}, {pipeline_mode = #tpu.pipeline_mode<synchronous>, transform_indices = @transform_3, window_bounds = array<i64: 8, 4>}, {pipeline_mode = #tpu.pipeline_mode<synchronous>, transform_indices = @transform_4, window_bounds = array<i64: 8, 4>}, {pipeline_mode = #tpu.pipeline_mode<synchronous>, transform_indices = @transform_5, window_bounds = array<i64: 8, 1>}, {pipeline_mode = #tpu.pipeline_mode<synchronous>, transform_indices = @transform_6, window_bounds = array<i64: 8, 1>}, {pipeline_mode = #tpu.pipeline_mode<synchronous>, transform_indices = @transform_7, window_bounds = array<i64: 1, 8>}, {pipeline_mode = #tpu.pipeline_mode<synchronous>, transform_indices = @transform_8, window_bounds = array<i64: 1, 1>}, {transform_indices = @transform_9, window_bounds = array<i64: 1, 4, 128>}]} {
    %c0 = arith.constant 0 : index
    %c0_0 = arith.constant 0 : index
    %0 = vector.load %arg4[%c0, %c0_0] : memref<8x4xf32, #tpu.memory_space<vmem>>, vector<8x4xf32>
    %c0_1 = arith.constant 0 : index
    %c0_2 = arith.constant 0 : index
    %1 = vector.load %arg5[%c0_1, %c0_2] : memref<8x4xf32, #tpu.memory_space<vmem>>, vector<8x4xf32>
    %c0_3 = arith.constant 0 : index
    %c0_4 = arith.constant 0 : index
    %2 = vector.load %arg6[%c0_3, %c0_4] : memref<8x4xf32, #tpu.memory_space<vmem>>, vector<8x4xf32>
    %c0_5 = arith.constant 0 : index
    %c0_6 = arith.constant 0 : index
    %3 = vector.load %arg7[%c0_5, %c0_6] : memref<8x1xf32, #tpu.memory_space<vmem>>, vector<8x1xf32>
    %c0_7 = arith.constant 0 : index
    %c0_8 = arith.constant 0 : index
    %4 = vector.load %arg8[%c0_7, %c0_8] : memref<8x1xf32, #tpu.memory_space<vmem>>, vector<8x1xf32>
    %c0_9 = arith.constant 0 : index
    %c0_10 = arith.constant 0 : index
    %5 = vector.load %arg9[%c0_9, %c0_10] : memref<1x8xf32, #tpu.memory_space<vmem>>, vector<1x8xf32>
    %c0_11 = arith.constant 0 : index
    %c0_12 = arith.constant 0 : index
    %6 = vector.load %arg10[%c0_11, %c0_12] : memref<1x1xf32, #tpu.memory_space<vmem>>, vector<1x1xf32>
    %c0_13 = arith.constant 0 : index
    %c0_14 = arith.constant 0 : index
    %c0_15 = arith.constant 0 : index
    %7 = vector.load %arg2[%c0_13, %c0_14, %c0_15] : memref<1x4x128xf32, #tpu.memory_space<vmem>>, vector<1x4x128xf32>
    %8 = vector.shape_cast %7 : vector<1x4x128xf32> to vector<4x128xf32>
    %c0_16 = arith.constant 0 : index
    %c0_17 = arith.constant 0 : index
    %c0_18 = arith.constant 0 : index
    %9 = vector.load %arg3[%c0_16, %c0_17, %c0_18] : memref<1x4x128xf32, #tpu.memory_space<vmem>>, vector<1x4x128xf32>
    %10 = vector.shape_cast %9 : vector<1x4x128xf32> to vector<4x128xf32>
    %cst = arith.constant dense<0.000000e+00> : vector<8x128xf32>
    %11 = tpu.matmul %0, %8, %cst {dimension_numbers = #tpu.dot_dimension_numbers<[1], [0], [0], [1], [0, 0, 1, 1], [], []>} : vector<8x4xf32>, vector<4x128xf32>, vector<8x128xf32> -> vector<8x128xf32>
    %cst_19 = arith.constant dense<0.000000e+00> : vector<8x128xf32>
    %12 = tpu.matmul %1, %10, %cst_19 {dimension_numbers = #tpu.dot_dimension_numbers<[1], [0], [0], [1], [0, 0, 1, 1], [], []>} : vector<8x4xf32>, vector<4x128xf32>, vector<8x128xf32> -> vector<8x128xf32>
    %13 = arith.addf %11, %12 : vector<8x128xf32>
    %14 = vector.broadcast %3 : vector<8x1xf32> to vector<8x128xf32>
    %15 = arith.addf %13, %14 : vector<8x128xf32>
    %cst_20 = arith.constant dense<0.000000e+00> : vector<8x128xf32>
    %16 = tpu.matmul %2, %10, %cst_20 {dimension_numbers = #tpu.dot_dimension_numbers<[1], [0], [0], [1], [0, 0, 1, 1], [], []>} : vector<8x4xf32>, vector<4x128xf32>, vector<8x128xf32> -> vector<8x128xf32>
    %17 = vector.broadcast %4 : vector<8x1xf32> to vector<8x128xf32>
    %18 = arith.addf %16, %17 : vector<8x128xf32>
    %cst_21 = arith.constant 0.000000e+00 : f32
    %19 = vector.broadcast %cst_21 : f32 to vector<8x128xf32>
    %20 = arith.maximumf %18, %19 : vector<8x128xf32>
    %21 = arith.addf %15, %20 : vector<8x128xf32>
    %cst_22 = arith.constant 0.000000e+00 : f32
    %22 = vector.broadcast %cst_22 : f32 to vector<8x128xf32>
    %23 = arith.maximumf %21, %22 : vector<8x128xf32>
    %cst_23 = arith.constant dense<0.000000e+00> : vector<1x128xf32>
    %24 = tpu.matmul %5, %23, %cst_23 {dimension_numbers = #tpu.dot_dimension_numbers<[1], [0], [0], [1], [0, 0, 1, 1], [], []>} : vector<1x8xf32>, vector<8x128xf32>, vector<1x128xf32> -> vector<1x128xf32>
    %25 = vector.broadcast %6 : vector<1x1xf32> to vector<1x128xf32>
    %26 = arith.addf %24, %25 : vector<1x128xf32>
    %27 = arith.negf %26 : vector<1x128xf32>
    %28 = math.exp %27 : vector<1x128xf32>
    %cst_24 = arith.constant 1.000000e+00 : f32
    %29 = vector.broadcast %cst_24 : f32 to vector<1x128xf32>
    %30 = arith.addf %29, %28 : vector<1x128xf32>
    %31 = arith.divf %29, %30 : vector<1x128xf32>
    %32 = vector.broadcast %31 : vector<1x128xf32> to vector<4x128xf32>
    %33 = arith.mulf %10, %32 : vector<4x128xf32>
    %c0_25 = arith.constant 0 : index
    %c0_26 = arith.constant 0 : index
    %c0_27 = arith.constant 0 : index
    %34 = vector.load %arg11[%c0_25, %c0_26, %c0_27] : memref<1x4x128xf32, #tpu.memory_space<vmem>>, vector<1x4x128xf32>
    %35 = vector.shape_cast %34 : vector<1x4x128xf32> to vector<4x128xf32>
    %36 = vector.shape_cast %33 : vector<4x128xf32> to vector<1x4x128xf32>
    tpu.vector_store %arg11[%c0_25, %c0_26, %c0_27], %36 {strides = array<i32>} : memref<1x4x128xf32, #tpu.memory_space<vmem>>, vector<1x4x128xf32>,
    return
  }
  func.func @transform_0(%arg0: i32, %arg1: i32) -> (i32, i32, i32) {
    %c0_i32 = arith.constant 0 : i32
    %c0_i32_0 = arith.constant 0 : i32
    return %arg0, %c0_i32, %arg1 : i32, i32, i32
  }
  func.func @transform_1(%arg0: i32, %arg1: i32) -> (i32, i32, i32) {
    %c0_i32 = arith.constant 0 : i32
    %c0_i32_0 = arith.constant 0 : i32
    return %arg0, %c0_i32, %arg1 : i32, i32, i32
  }
  func.func @transform_2(%arg0: i32, %arg1: i32) -> (i32, i32) {
    %c0_i32 = arith.constant 0 : i32
    %c0_i32_0 = arith.constant 0 : i32
    %c0_i32_1 = arith.constant 0 : i32
    return %c0_i32, %c0_i32_0 : i32, i32
  }
  func.func @transform_3(%arg0: i32, %arg1: i32) -> (i32, i32) {
    %c0_i32 = arith.constant 0 : i32
    %c0_i32_0 = arith.constant 0 : i32
    %c0_i32_1 = arith.constant 0 : i32
    return %c0_i32, %c0_i32_0 : i32, i32
  }
  func.func @transform_4(%arg0: i32, %arg1: i32) -> (i32, i32) {
    %c0_i32 = arith.constant 0 : i32
    %c0_i32_0 = arith.constant 0 : i32
    %c0_i32_1 = arith.constant 0 : i32
    return %c0_i32, %c0_i32_0 : i32, i32
  }
  func.func @transform_5(%arg0: i32, %arg1: i32) -> (i32, i32) {
    %c0_i32 = arith.constant 0 : i32
    %c0_i32_0 = arith.constant 0 : i32
    %c0_i32_1 = arith.constant 0 : i32
    return %c0_i32, %c0_i32_0 : i32, i32
  }
  func.func @transform_6(%arg0: i32, %arg1: i32) -> (i32, i32) {
    %c0_i32 = arith.constant 0 : i32
    %c0_i32_0 = arith.constant 0 : i32
    %c0_i32_1 = arith.constant 0 : i32
    return %c0_i32, %c0_i32_0 : i32, i32
  }
  func.func @transform_7(%arg0: i32, %arg1: i32) -> (i32, i32) {
    %c0_i32 = arith.constant 0 : i32
    %c0_i32_0 = arith.constant 0 : i32
    %c0_i32_1 = arith.constant 0 : i32
    return %c0_i32, %c0_i32_0 : i32, i32
  }
  func.func @transform_8(%arg0: i32, %arg1: i32) -> (i32, i32) {
    %c0_i32 = arith.constant 0 : i32
    %c0_i32_0 = arith.constant 0 : i32
    %c0_i32_1 = arith.constant 0 : i32
    return %c0_i32, %c0_i32_0 : i32, i32
  }
  func.func @transform_9(%arg0: i32, %arg1: i32) -> (i32, i32, i32) {
    %c0_i32 = arith.constant 0 : i32
    %c0_i32_0 = arith.constant 0 : i32
    return %arg0, %c0_i32, %arg1 : i32, i32, i32
  }
}

</mosaic_0001>

<llo_original>
// kernel: tpu_custom_call.1
$region0: #{tpu_custom_call.1}
  #allocation0 [shape = 'u32[]', space=smem, size = 0x4, offset = 0x4, fixed_abs, tag = 'smem constant byte address 0x4 - core index']
  #allocation1 [shape = 'u32[144,128]{1,0:T(1,128)}', space=vmem, size = 0x12000, scoped, tag = 'internal scratch']
  #allocation2 [shape = 'f32[1,1]{1,0:T(1,128)S(1)}', space=vmem, size = 0x200, scoped, tag = 'scoped memory for tpu_custom_call.1']
  %s0 = inlined_call_operand.vmem [shape: f32[2,4,256], index: 0, kind: input, shape index: {}]
  %s1 = inlined_call_operand.vmem [shape: f32[2,4,256], index: 1, kind: input, shape index: {}]
  %s2 = inlined_call_operand.vmem [shape: f32[8,4], index: 2, kind: input, shape index: {}]
  %s3 = inlined_call_operand.vmem [shape: f32[8,4], index: 3, kind: input, shape index: {}]
  %s4 = inlined_call_operand.vmem [shape: f32[8,4], index: 4, kind: input, shape index: {}]
  %s5 = inlined_call_operand.vmem [shape: f32[8,1], index: 5, kind: input, shape index: {}]
  %s6 = inlined_call_operand.vmem [shape: f32[8,1], index: 6, kind: input, shape index: {}]
  %s7 = inlined_call_operand.vmem [shape: f32[1,8], index: 7, kind: input, shape index: {}]
  %s8 = inlined_call_operand.<no memory space> [shape: f32[1,1], index: 8, kind: input, shape index: {}]
  %s9 = inlined_call_operand.hbm [shape: f32[2,4,256], index: 9, kind: output, shape index: {}]
  %s10 = sld [smem:[#allocation0]]
  $region69: #{tpu_custom_call.1} parent=0
    _
  %s12 = ssub.s32 1, %s10
  %s13 = scalar_select 0, %s12, %s10
  %v14 = vstv %s8
  %15 = vst [vmem:[#allocation2] sm:$0x1] %v14
  $region1: #{tpu_custom_call.1} parent=0
    #allocation3 [shape = 'u8[4096]{0}', space=vmem, size = 0x1000, scoped, tag = 'output window, operand 0']
    #allocation4 [shape = 's32[2]{0}', space=sflag, size = 0x8, scoped, tag = 'scoped memory for tpu_custom_call.1']
    %16 = vsyncpa [#allocation4], 0
    %s17 = scalar_lea.sflag [#allocation4], 1
    %18 = vsyncpa %s17, 0
    loop: start=0, step=1, limit=6
    $region2: #{tpu_custom_call.1} parent=1 // loop_pre_header
      _
    $region3: #{tpu_custom_call.1} parent=1 // loop_header
      %s20 = sphi 0, %s24
      %p21 = scmp.ge.s32.totalorder %s20, 6
      %s27 = sphi 0, %s39
      %s28 = sphi 0, %s35
      %s29 = sphi 0, %s27
      %s30 = sphi 0, %s28
      %s31 = sphi 0, %s29
      %s32 = sphi 0, %s30
      %s44 = sphi 0, %s46
      %s47 = sphi 0, %s44
      %s48 = sphi 0, %s47
      %s64 = sphi 0, %s48
      %s72 = sphi 0, %s74
      %s75 = sphi 0, %s72
      %s76 = sphi 0, %s75
      %s92 = sphi 0, %s76
      %s96 = sphi 0, %s96
      %s98 = sphi 0, %s96
      %s99 = sphi 0, %s98
      %s113 = sphi 0, %s99
      %s117 = sphi 0, %s117
      %s119 = sphi 0, %s117
      %s120 = sphi 0, %s119
      %s134 = sphi 0, %s120
      %s138 = sphi 0, %s138
      %s140 = sphi 0, %s138
      %s141 = sphi 0, %s140
      %s155 = sphi 0, %s141
      %s159 = sphi 0, %s159
      %s161 = sphi 0, %s159
      %s162 = sphi 0, %s161
      %s176 = sphi 0, %s162
      %s180 = sphi 0, %s180
      %s182 = sphi 0, %s180
      %s183 = sphi 0, %s182
      %s197 = sphi 0, %s183
      %s201 = sphi 0, %s201
      %s203 = sphi 0, %s201
      %s204 = sphi 0, %s203
      %s218 = sphi 0, %s204
      %s222 = sphi 0, %s222
      %s224 = sphi 0, %s222
      %s225 = sphi 0, %s224
      %s239 = sphi 0, %s225
      %s247 = sphi 0, %s249
      %s250 = sphi 0, %s247
      %s251 = sphi 0, %s250
      %s267 = sphi 0, %s251
    $region4: #{tpu_custom_call.1} parent=1 // loop_header_branch
      %23 = sbr.rel (%p21) target = $region8
    $region5: #{tpu_custom_call.1} parent=1 // loop_body
      %s25 = ssub.s32 %s20, 1
      %s26 = ssub.s32 %s20, 2
      %s33 = sadd.s32 1, %s28
      %p34 = scmp.ge.s32.totalorder %s33, 2
      %s35 = scalar_select %p34, 0, %s33
      %s36 = sadd.s32 1, %s27
      %s37 = scalar_select %p34, %s36, %s27
      %p38 = scmp.ge.s32.totalorder %s37, 2
      %s39 = scalar_select %p38, 0, %s37
      %s40 = ssub.s32 %s27, %s39
      %s41 = ssub.s32 %s28, %s35
      %s42 = sor.u32 %s40, %s41
      %p43 = scmp.eq.s32.totalorder %s42, 0
      %s45 = sadd.s32 %s44, 1
      %s46 = scalar_select %p43, %s44, %s45
      %p49 = pneg %p43
      %p50 = scmp.eq.s32.totalorder %s20, 3
      %p51 = por %p49, %p50
      %p52 = scmp.ne.s32.totalorder %s44, %s47
      %p53 = scmp.eq.s32.totalorder %s20, 0
      %p54 = por %p52, %p53
      %p55 = scmp.ne.s32.totalorder %s44, %s47
      %p56 = scmp.eq.s32.totalorder %s25, 3
      %p57 = por %p55, %p56
      %p58 = scmp.ne.s32.totalorder %s47, %s48
      %p59 = scmp.eq.s32.totalorder %s25, 0
      %p60 = por %p58, %p59
      %p61 = scmp.ne.s32.totalorder %s47, %s48
      %p62 = scmp.eq.s32.totalorder %s26, 3
      %p63 = por %p61, %p62
      %p65 = scmp.ne.s32.totalorder %s48, %s64
      %p66 = scmp.eq.s32.totalorder %s26, 0
      %p67 = por %p65, %p66
      %s68 = ssub.s32 %s27, %s39
      %s69 = ssub.s32 %s28, %s35
      %s70 = sor.u32 %s68, %s69
      %p71 = scmp.eq.s32.totalorder %s70, 0
      %s73 = sadd.s32 %s72, 1
      %s74 = scalar_select %p71, %s72, %s73
      %p77 = pneg %p71
      %p78 = scmp.eq.s32.totalorder %s20, 3
      %p79 = por %p77, %p78
      %p80 = scmp.ne.s32.totalorder %s72, %s75
      %p81 = scmp.eq.s32.totalorder %s20, 0
      %p82 = por %p80, %p81
      %p83 = scmp.ne.s32.totalorder %s72, %s75
      %p84 = scmp.eq.s32.totalorder %s25, 3
      %p85 = por %p83, %p84
      %p86 = scmp.ne.s32.totalorder %s75, %s76
      %p87 = scmp.eq.s32.totalorder %s25, 0
      %p88 = por %p86, %p87
      %p89 = scmp.ne.s32.totalorder %s75, %s76
      %p90 = scmp.eq.s32.totalorder %s26, 3
      %p91 = por %p89, %p90
      %p93 = scmp.ne.s32.totalorder %s76, %s92
      %p94 = scmp.eq.s32.totalorder %s26, 0
      %p95 = por %p93, %p94
      %s97 = sadd.s32 %s96, 1
      %p100 = scmp.eq.s32.totalorder %s20, 3
      %p101 = scmp.ne.s32.totalorder %s96, %s98
      %p102 = scmp.eq.s32.totalorder %s20, 0
      %p103 = por %p101, %p102
      %p104 = scmp.ne.s32.totalorder %s96, %s98
      %p105 = scmp.eq.s32.totalorder %s25, 3
      %p106 = por %p104, %p105
      %p107 = scmp.ne.s32.totalorder %s98, %s99
      %p108 = scmp.eq.s32.totalorder %s25, 0
      %p109 = por %p107, %p108
      %p110 = scmp.ne.s32.totalorder %s98, %s99
      %p111 = scmp.eq.s32.totalorder %s26, 3
      %p112 = por %p110, %p111
      %p114 = scmp.ne.s32.totalorder %s99, %s113
      %p115 = scmp.eq.s32.totalorder %s26, 0
      %p116 = por %p114, %p115
      %s118 = sadd.s32 %s117, 1
      %p121 = scmp.eq.s32.totalorder %s20, 3
      %p122 = scmp.ne.s32.totalorder %s117, %s119
      %p123 = scmp.eq.s32.totalorder %s20, 0
      %p124 = por %p122, %p123
      %p125 = scmp.ne.s32.totalorder %s117, %s119
      %p126 = scmp.eq.s32.totalorder %s25, 3
      %p127 = por %p125, %p126
      %p128 = scmp.ne.s32.totalorder %s119, %s120
      %p129 = scmp.eq.s32.totalorder %s25, 0
      %p130 = por %p128, %p129
      %p131 = scmp.ne.s32.totalorder %s119, %s120
      %p132 = scmp.eq.s32.totalorder %s26, 3
      %p133 = por %p131, %p132
      %p135 = scmp.ne.s32.totalorder %s120, %s134
      %p136 = scmp.eq.s32.totalorder %s26, 0
      %p137 = por %p135, %p136
      %s139 = sadd.s32 %s138, 1
      %p142 = scmp.eq.s32.totalorder %s20, 3
      %p143 = scmp.ne.s32.totalorder %s138, %s140
      %p144 = scmp.eq.s32.totalorder %s20, 0
      %p145 = por %p143, %p144
      %p146 = scmp.ne.s32.totalorder %s138, %s140
      %p147 = scmp.eq.s32.totalorder %s25, 3
      %p148 = por %p146, %p147
      %p149 = scmp.ne.s32.totalorder %s140, %s141
      %p150 = scmp.eq.s32.totalorder %s25, 0
      %p151 = por %p149, %p150
      %p152 = scmp.ne.s32.totalorder %s140, %s141
      %p153 = scmp.eq.s32.totalorder %s26, 3
      %p154 = por %p152, %p153
      %p156 = scmp.ne.s32.totalorder %s141, %s155
      %p157 = scmp.eq.s32.totalorder %s26, 0
      %p158 = por %p156, %p157
      %s160 = sadd.s32 %s159, 1
      %p163 = scmp.eq.s32.totalorder %s20, 3
      %p164 = scmp.ne.s32.totalorder %s159, %s161
      %p165 = scmp.eq.s32.totalorder %s20, 0
      %p166 = por %p164, %p165
      %p167 = scmp.ne.s32.totalorder %s159, %s161
      %p168 = scmp.eq.s32.totalorder %s25, 3
      %p169 = por %p167, %p168
      %p170 = scmp.ne.s32.totalorder %s161, %s162
      %p171 = scmp.eq.s32.totalorder %s25, 0
      %p172 = por %p170, %p171
      %p173 = scmp.ne.s32.totalorder %s161, %s162
      %p174 = scmp.eq.s32.totalorder %s26, 3
      %p175 = por %p173, %p174
      %p177 = scmp.ne.s32.totalorder %s162, %s176
      %p178 = scmp.eq.s32.totalorder %s26, 0
      %p179 = por %p177, %p178
      %s181 = sadd.s32 %s180, 1
      %p184 = scmp.eq.s32.totalorder %s20, 3
      %p185 = scmp.ne.s32.totalorder %s180, %s182
      %p186 = scmp.eq.s32.totalorder %s20, 0
      %p187 = por %p185, %p186
      %p188 = scmp.ne.s32.totalorder %s180, %s182
      %p189 = scmp.eq.s32.totalorder %s25, 3
      %p190 = por %p188, %p189
      %p191 = scmp.ne.s32.totalorder %s182, %s183
      %p192 = scmp.eq.s32.totalorder %s25, 0
      %p193 = por %p191, %p192
      %p194 = scmp.ne.s32.totalorder %s182, %s183
      %p195 = scmp.eq.s32.totalorder %s26, 3
      %p196 = por %p194, %p195
      %p198 = scmp.ne.s32.totalorder %s183, %s197
      %p199 = scmp.eq.s32.totalorder %s26, 0
      %p200 = por %p198, %p199
      %s202 = sadd.s32 %s201, 1
      %p205 = scmp.eq.s32.totalorder %s20, 3
      %p206 = scmp.ne.s32.totalorder %s201, %s203
      %p207 = scmp.eq.s32.totalorder %s20, 0
      %p208 = por %p206, %p207
      %p209 = scmp.ne.s32.totalorder %s201, %s203
      %p210 = scmp.eq.s32.totalorder %s25, 3
      %p211 = por %p209, %p210
      %p212 = scmp.ne.s32.totalorder %s203, %s204
      %p213 = scmp.eq.s32.totalorder %s25, 0
      %p214 = por %p212, %p213
      %p215 = scmp.ne.s32.totalorder %s203, %s204
      %p216 = scmp.eq.s32.totalorder %s26, 3
      %p217 = por %p215, %p216
      %p219 = scmp.ne.s32.totalorder %s204, %s218
      %p220 = scmp.eq.s32.totalorder %s26, 0
      %p221 = por %p219, %p220
      %s223 = sadd.s32 %s222, 1
      %p226 = scmp.eq.s32.totalorder %s20, 3
      %p227 = scmp.ne.s32.totalorder %s222, %s224
      %p228 = scmp.eq.s32.totalorder %s20, 0
      %p229 = por %p227, %p228
      %p230 = scmp.ne.s32.totalorder %s222, %s224
      %p231 = scmp.eq.s32.totalorder %s25, 3
      %p232 = por %p230, %p231
      %p233 = scmp.ne.s32.totalorder %s224, %s225
      %p234 = scmp.eq.s32.totalorder %s25, 0
      %p235 = por %p233, %p234
      %p236 = scmp.ne.s32.totalorder %s224, %s225
      %p237 = scmp.eq.s32.totalorder %s26, 3
      %p238 = por %p236, %p237
      %p240 = scmp.ne.s32.totalorder %s225, %s239
      %p241 = scmp.eq.s32.totalorder %s26, 0
      %p242 = por %p240, %p241
      %s243 = ssub.s32 %s27, %s39
      %s244 = ssub.s32 %s28, %s35
      %s245 = sor.u32 %s243, %s244
      %p246 = scmp.eq.s32.totalorder %s245, 0
      %s248 = sadd.s32 %s247, 1
      %s249 = scalar_select %p246, %s247, %s248
      %p252 = pneg %p246
      %p253 = scmp.eq.s32.totalorder %s20, 3
      %p254 = por %p252, %p253
      %p255 = scmp.ne.s32.totalorder %s247, %s250
      %p256 = scmp.eq.s32.totalorder %s20, 0
      %p257 = por %p255, %p256
      %p258 = scmp.ne.s32.totalorder %s247, %s250
      %p259 = scmp.eq.s32.totalorder %s25, 3
      %p260 = por %p258, %p259
      %p261 = scmp.ne.s32.totalorder %s250, %s251
      %p262 = scmp.eq.s32.totalorder %s25, 0
      %p263 = por %p261, %p262
      %p264 = scmp.ne.s32.totalorder %s250, %s251
      %p265 = scmp.eq.s32.totalorder %s26, 3
      %p266 = por %p264, %p265
      %p268 = scmp.ne.s32.totalorder %s251, %s267
      %p269 = scmp.eq.s32.totalorder %s26, 0
      %p270 = por %p268, %p269
      %p271 = scmp.le.s32.totalorder 1, %s20
      %p272 = scmp.lt.s32.totalorder %s20, 5
      %p273 = pnand %p271, %p272
      %p274 = pneg %p273
      // Predicated region
      $region9: #{tpu_custom_call.1} parent=5 // pred_check
        _
      $region10: #{tpu_custom_call.1} parent=5 // pred_check_branch
        %276 = sbr.rel (%p273) target = $region12
      $region11: #{tpu_custom_call.1} parent=5 // pred_region
        %s277 = ssub.s32 %s20, 1
        // Predicated region
        $region13: #{tpu_custom_call.1} parent=11 // pred_check
          %p278 = pneg %p109
        $region14: #{tpu_custom_call.1} parent=11 // pred_check_branch
          %280 = sbr.rel (%p278) target = $region16
        $region15: #{tpu_custom_call.1} parent=11 // pred_region
          _
        $region16: #{tpu_custom_call.1} parent=11 // pred_fallthru
          _
        // Predicated region
        $region17: #{tpu_custom_call.1} parent=11 // pred_check
          %p281 = pneg %p130
        $region18: #{tpu_custom_call.1} parent=11 // pred_check_branch
          %283 = sbr.rel (%p281) target = $region20
        $region19: #{tpu_custom_call.1} parent=11 // pred_region
          _
        $region20: #{tpu_custom_call.1} parent=11 // pred_fallthru
          _
        // Predicated region
        $region21: #{tpu_custom_call.1} parent=11 // pred_check
          %p284 = pneg %p151
        $region22: #{tpu_custom_call.1} parent=11 // pred_check_branch
          %286 = sbr.rel (%p284) target = $region24
        $region23: #{tpu_custom_call.1} parent=11 // pred_region
          _
        $region24: #{tpu_custom_call.1} parent=11 // pred_fallthru
          _
        // Predicated region
        $region25: #{tpu_custom_call.1} parent=11 // pred_check
          %p287 = pneg %p172
        $region26: #{tpu_custom_call.1} parent=11 // pred_check_branch
          %289 = sbr.rel (%p287) target = $region28
        $region27: #{tpu_custom_call.1} parent=11 // pred_region
          _
        $region28: #{tpu_custom_call.1} parent=11 // pred_fallthru
          _
        // Predicated region
        $region29: #{tpu_custom_call.1} parent=11 // pred_check
          %p290 = pneg %p193
        $region30: #{tpu_custom_call.1} parent=11 // pred_check_branch
          %292 = sbr.rel (%p290) target = $region32
        $region31: #{tpu_custom_call.1} parent=11 // pred_region
          _
        $region32: #{tpu_custom_call.1} parent=11 // pred_fallthru
          _
        // Predicated region
        $region33: #{tpu_custom_call.1} parent=11 // pred_check
          %p293 = pneg %p214
        $region34: #{tpu_custom_call.1} parent=11 // pred_check_branch
          %295 = sbr.rel (%p293) target = $region36
        $region35: #{tpu_custom_call.1} parent=11 // pred_region
          _
        $region36: #{tpu_custom_call.1} parent=11 // pred_fallthru
          _
        // Predicated region
        $region37: #{tpu_custom_call.1} parent=11 // pred_check
          %p296 = pneg %p235
        $region38: #{tpu_custom_call.1} parent=11 // pred_check_branch
          %298 = sbr.rel (%p296) target = $region40
        $region39: #{tpu_custom_call.1} parent=11 // pred_region
          _
        $region40: #{tpu_custom_call.1} parent=11 // pred_fallthru
          _
      $region12: #{tpu_custom_call.1} parent=5 // pred_fallthru
        _
      %p299 = scmp.lt.s32.totalorder %s20, 4
      // Predicated region
      $region41: #{tpu_custom_call.1} parent=5 // pred_check
        %p300 = pneg %p299
      $region42: #{tpu_custom_call.1} parent=5 // pred_check_branch
        %302 = sbr.rel (%p300) target = $region44
      $region43: #{tpu_custom_call.1} parent=5 // pred_region
        // Predicated region
        $region45: #{tpu_custom_call.1} parent=43 // pred_check
          %p303 = pneg %p54
        $region46: #{tpu_custom_call.1} parent=43 // pred_check_branch
          %305 = sbr.rel (%p303) target = $region48
        $region47: #{tpu_custom_call.1} parent=43 // pred_region
          %p306 = scmp.lt.s32.totalorder %s27, 1
          %s307 = scalar_select %p306, %s27, 1
          %p308 = scmp.lt.s32.totalorder %s28, 1
          %s309 = scalar_select %p308, %s28, 1
          %s310 = smul.addr %s307, 2
          %s311 = sadd.s32 %s309, %s310
          %s312 = smul.addr %s311, 4
          %s313 = scalar_lea.vmem %s0, %s312
        $region48: #{tpu_custom_call.1} parent=43 // pred_fallthru
          _
        // Predicated region
        $region49: #{tpu_custom_call.1} parent=43 // pred_check
          %p314 = pneg %p82
        $region50: #{tpu_custom_call.1} parent=43 // pred_check_branch
          %316 = sbr.rel (%p314) target = $region52
        $region51: #{tpu_custom_call.1} parent=43 // pred_region
          %p317 = scmp.lt.s32.totalorder %s27, 1
          %s318 = scalar_select %p317, %s27, 1
          %p319 = scmp.lt.s32.totalorder %s28, 1
          %s320 = scalar_select %p319, %s28, 1
          %s321 = smul.addr %s318, 2
          %s322 = sadd.s32 %s320, %s321
          %s323 = smul.addr %s322, 4
          %s324 = scalar_lea.vmem %s1, %s323
        $region52: #{tpu_custom_call.1} parent=43 // pred_fallthru
          _
      $region44: #{tpu_custom_call.1} parent=5 // pred_fallthru
        _
      %p325 = scmp.le.s32.totalorder 1, %s20
      %p326 = scmp.lt.s32.totalorder %s20, 5
      %p327 = pnand %p325, %p326
      %p328 = pneg %p327
      // Predicated region
      $region53: #{tpu_custom_call.1} parent=5 // pred_check
        _
      $region54: #{tpu_custom_call.1} parent=5 // pred_check_branch
        %330 = sbr.rel (%p327) target = $region56
      $region55: #{tpu_custom_call.1} parent=5 // pred_region
        %s331 = ssub.s32 %s20, 1
        %p332 = scmp.lt.s32.totalorder %s29, 1
        %s333 = scalar_select %p332, %s29, 1
        %p334 = scmp.lt.s32.totalorder %s30, 1
        %s335 = scalar_select %p334, %s30, 1
        %s336 = smul.addr %s333, 2
        %s337 = sadd.s32 %s335, %s336
        %s338 = smul.addr %s337, 4
        %s339 = scalar_lea.vmem %s0, %s338
        %p340 = pneg %p60
        %p341 = pneg %p57
        %p342 = scmp.lt.s32.totalorder %s29, 1
        %s343 = scalar_select %p342, %s29, 1
        %p344 = scmp.lt.s32.totalorder %s30, 1
        %s345 = scalar_select %p344, %s30, 1
        %s346 = smul.addr %s343, 2
        %s347 = sadd.s32 %s345, %s346
        %s348 = smul.addr %s347, 4
        %s349 = scalar_lea.vmem %s1, %s348
        %p350 = pneg %p88
        %p351 = pneg %p85
        %p352 = pneg %p109
        %p353 = pneg %p106
        %p354 = pneg %p130
        %p355 = pneg %p127
        %p356 = pneg %p151
        %p357 = pneg %p148
        %p358 = pneg %p172
        %p359 = pneg %p169
        %p360 = pneg %p193
        %p361 = pneg %p190
        %p362 = pneg %p214
        %p363 = pneg %p211
        %p364 = pneg %p235
        %p365 = pneg %p232
        %p366 = pneg %p263
        %p367 = pneg %p260
        %s368 = sand.u32 %s250, 1
        %s369 = scalar_lea.sflag [#allocation4], %s368
        %s370 = sand.u32 %s250, 1
        %s371 = smul.addr %s370, 4
        %s372 = scalar_lea.vmem [#allocation3], %s371
        %p373 = scmp.lt.s32.totalorder %s29, 1
        %s374 = scalar_select %p373, %s29, 1
        %p375 = scmp.lt.s32.totalorder %s30, 1
        %s376 = scalar_select %p375, %s30, 1
        %s377 = smul.addr %s374, 2
        %s378 = sadd.s32 %s376, %s377
        %s379 = smul.addr %s378, 4
        %s380 = scalar_lea.vmem %s0, %s379
        %p381 = scmp.lt.s32.totalorder %s29, 1
        %s382 = scalar_select %p381, %s29, 1
        %p383 = scmp.lt.s32.totalorder %s30, 1
        %s384 = scalar_select %p383, %s30, 1
        %s385 = smul.addr %s382, 2
        %s386 = sadd.s32 %s384, %s385
        %s387 = smul.addr %s386, 4
        %s388 = scalar_lea.vmem %s1, %s387
        %v389 = vld [vmem:[%s2] sm:$0xff]
        %v390 = vld [vmem:[%s3] sm:$0xff]
        %v391 = vld [vmem:[%s4] sm:$0xff]
        %v392 = vld [vmem:[%s5] sm:$0xff]
        %v393 = vld [vmem:[%s6] sm:$0xff]
        %v394 = vld [vmem:[%s7] sm:$0x1]
        %v395 = vld [vmem:[#allocation2] sm:$0x1]
        %v396 = vld [vmem:[%s380] sm:$0xf]
        %v397 = vld [vmem:[%s388] sm:$0xf]
        %vm398 = vcmask 31744
        %v400 = vsel %vm398, %v390, 0
        %vm402 = vcmask 1043456
        %v404 = vsel %vm402, %v397, 0
        %406 = vmatprep.subr.mxu0 0.0
        %407 = vmatpush1.msra.mxu0 0.0
        %408 = vmatprep.subr.mxu0 0.0
        %409 = vmatpush1.msra.mxu0 0.0
        %410 = vmatprep.subr.mxu0 0.0
        %411 = vmatpush1.msra.mxu0 0.0
        %412 = vmatprep.subr.mxu0 0.0
        %413 = vmatpush1.msra.mxu0 0.0
        %414 = vmatprep.subr.mxu0 0.0
        %415 = vmatpush1.msra.mxu0 0.0
        %416 = vmatprep.subr.mxu0 0.0
        %417 = vmatpush1.msra.mxu0 0.0
        %418 = vmatprep.subr.mxu0 0.0
        %419 = vmatpush1.msra.mxu0 0.0
        %420 = vmatprep.subr.mxu0 0.0
        %421 = vmatpush1.msra.mxu0 0.0
        %422 = vmatprep.subr.mxu0 0.0
        %423 = vmatpush1.msra.mxu0 0.0
        %424 = vmatprep.subr.mxu0 0.0
        %425 = vmatpush1.msra.mxu0 0.0
        %426 = vmatprep.subr.mxu0 0.0
        %427 = vmatpush1.msra.mxu0 0.0
        %428 = vmatprep.subr.mxu0 0.0
        %429 = vmatpush1.msra.mxu0 0.0
        %430 = vmatprep.subr.mxu0 0.0
        %431 = vmatpush1.msra.mxu0 0.0
        %432 = vmatprep.subr.mxu0 0.0
        %433 = vmatpush1.msra.mxu0 0.0
        %434 = vmatprep.subr.mxu0 0.0
        %435 = vmatpush1.msra.mxu0 0.0
        %436 = vmatprep.subr.mxu0 0.0
        %437 = vmatpush1.msra.mxu0 %v404
        %438 = vmatprep.subr.mxu0 0.0
        %439 = vmatpush2.msra.mxu0 0.0
        %440 = vmatprep.subr.mxu0 0.0
        %441 = vmatpush2.msra.mxu0 0.0
        %442 = vmatprep.subr.mxu0 0.0
        %443 = vmatpush2.msra.mxu0 0.0
        %444 = vmatprep.subr.mxu0 0.0
        %445 = vmatpush2.msra.mxu0 0.0
        %446 = vmatprep.subr.mxu0 0.0
        %447 = vmatpush2.msra.mxu0 0.0
        %448 = vmatprep.subr.mxu0 0.0
        %449 = vmatpush2.msra.mxu0 0.0
        %450 = vmatprep.subr.mxu0 0.0
        %451 = vmatpush2.msra.mxu0 0.0
        %452 = vmatprep.subr.mxu0 0.0
        %453 = vmatpush2.msra.mxu0 0.0
        %454 = vmatprep.subr.mxu0 0.0
        %455 = vmatpush2.msra.mxu0 0.0
        %456 = vmatprep.subr.mxu0 0.0
        %457 = vmatpush2.msra.mxu0 0.0
        %458 = vmatprep.subr.mxu0 0.0
        %459 = vmatpush2.msra.mxu0 0.0
        %460 = vmatprep.subr.mxu0 0.0
        %461 = vmatpush2.msra.mxu0 0.0
        %462 = vmatprep.subr.mxu0 0.0
        %463 = vmatpush2.msra.mxu0 0.0
        %464 = vmatprep.subr.mxu0 0.0
        %465 = vmatpush2.msra.mxu0 0.0
        %466 = vmatprep.subr.mxu0 0.0
        %467 = vmatpush2.msra.mxu0 0.0
        %468 = vmatprep.subr.mxu0 0.0
        %469 = vmatpush2.msra.mxu0 0.0
        %470 = vmatprep.mubr.f32.mxu0 0.0
        %471 = vmatmul.mubr.f32.gmra.mxu0 %v400
        %v472 = vpop.f32.mrf.mxu0
        %v473 = vadd.f32 0.0, %v472
        %v474 = vpop.f32.mrf.mxu0
        %475 = vdwg.mxu0
        %v477 = vsel %vm398, %v389, 0
        %v480 = vsel %vm402, %v396, 0
        %482 = vmatprep.subr.mxu0 0.0
        %483 = vmatpush1.msra.mxu0 0.0
        %484 = vmatprep.subr.mxu0 0.0
        %485 = vmatpush1.msra.mxu0 0.0
        %486 = vmatprep.subr.mxu0 0.0
        %487 = vmatpush1.msra.mxu0 0.0
        %488 = vmatprep.subr.mxu0 0.0
        %489 = vmatpush1.msra.mxu0 0.0
        %490 = vmatprep.subr.mxu0 0.0
        %491 = vmatpush1.msra.mxu0 0.0
        %492 = vmatprep.subr.mxu0 0.0
        %493 = vmatpush1.msra.mxu0 0.0
        %494 = vmatprep.subr.mxu0 0.0
        %495 = vmatpush1.msra.mxu0 0.0
        %496 = vmatprep.subr.mxu0 0.0
        %497 = vmatpush1.msra.mxu0 0.0
        %498 = vmatprep.subr.mxu0 0.0
        %499 = vmatpush1.msra.mxu0 0.0
        %500 = vmatprep.subr.mxu0 0.0
        %501 = vmatpush1.msra.mxu0 0.0
        %502 = vmatprep.subr.mxu0 0.0
        %503 = vmatpush1.msra.mxu0 0.0
        %504 = vmatprep.subr.mxu0 0.0
        %505 = vmatpush1.msra.mxu0 0.0
        %506 = vmatprep.subr.mxu0 0.0
        %507 = vmatpush1.msra.mxu0 0.0
        %508 = vmatprep.subr.mxu0 0.0
        %509 = vmatpush1.msra.mxu0 0.0
        %510 = vmatprep.subr.mxu0 0.0
        %511 = vmatpush1.msra.mxu0 0.0
        %512 = vmatprep.subr.mxu0 0.0
        %513 = vmatpush1.msra.mxu0 %v480
        %514 = vmatprep.subr.mxu0 0.0
        %515 = vmatpush2.msra.mxu0 0.0
        %516 = vmatprep.subr.mxu0 0.0
        %517 = vmatpush2.msra.mxu0 0.0
        %518 = vmatprep.subr.mxu0 0.0
        %519 = vmatpush2.msra.mxu0 0.0
        %520 = vmatprep.subr.mxu0 0.0
        %521 = vmatpush2.msra.mxu0 0.0
        %522 = vmatprep.subr.mxu0 0.0
        %523 = vmatpush2.msra.mxu0 0.0
        %524 = vmatprep.subr.mxu0 0.0
        %525 = vmatpush2.msra.mxu0 0.0
        %526 = vmatprep.subr.mxu0 0.0
        %527 = vmatpush2.msra.mxu0 0.0
        %528 = vmatprep.subr.mxu0 0.0
        %529 = vmatpush2.msra.mxu0 0.0
        %530 = vmatprep.subr.mxu0 0.0
        %531 = vmatpush2.msra.mxu0 0.0
        %532 = vmatprep.subr.mxu0 0.0
        %533 = vmatpush2.msra.mxu0 0.0
        %534 = vmatprep.subr.mxu0 0.0
        %535 = vmatpush2.msra.mxu0 0.0
        %536 = vmatprep.subr.mxu0 0.0
        %537 = vmatpush2.msra.mxu0 0.0
        %538 = vmatprep.subr.mxu0 0.0
        %539 = vmatpush2.msra.mxu0 0.0
        %540 = vmatprep.subr.mxu0 0.0
        %541 = vmatpush2.msra.mxu0 0.0
        %542 = vmatprep.subr.mxu0 0.0
        %543 = vmatpush2.msra.mxu0 0.0
        %544 = vmatprep.subr.mxu0 0.0
        %545 = vmatpush2.msra.mxu0 0.0
        %546 = vmatprep.mubr.f32.mxu0 0.0
        %547 = vmatmul.mubr.f32.gmra.mxu0 %v477
        %v548 = vpop.f32.mrf.mxu0
        %v549 = vadd.f32 %v473, %v548
        %v550 = vpop.f32.mrf.mxu0
        %551 = vdwg.mxu0
        %553 = vset.pattern.permute.xlu0 0
        %554 = vperm.xlu0 %553, %v392
        %v555 = vpop.permute.xlu0 %554
        %v557 = vadd.f32 %v549, %v555
        %559 = vset.pattern.permute.xlu0 0
        %560 = vperm.xlu0 %559, %v393
        %v561 = vpop.permute.xlu0 %560
        %v564 = vsel %vm398, %v391, 0
        %566 = vmatprep.subr.mxu0 0.0
        %567 = vmatpush1.msra.mxu0 0.0
        %568 = vmatprep.subr.mxu0 0.0
        %569 = vmatpush1.msra.mxu0 0.0
        %570 = vmatprep.subr.mxu0 0.0
        %571 = vmatpush1.msra.mxu0 0.0
        %572 = vmatprep.subr.mxu0 0.0
        %573 = vmatpush1.msra.mxu0 0.0
        %574 = vmatprep.subr.mxu0 0.0
        %575 = vmatpush1.msra.mxu0 0.0
        %576 = vmatprep.subr.mxu0 0.0
        %577 = vmatpush1.msra.mxu0 0.0
        %578 = vmatprep.subr.mxu0 0.0
        %579 = vmatpush1.msra.mxu0 0.0
        %580 = vmatprep.subr.mxu0 0.0
        %581 = vmatpush1.msra.mxu0 0.0
        %582 = vmatprep.subr.mxu0 0.0
        %583 = vmatpush1.msra.mxu0 0.0
        %584 = vmatprep.subr.mxu0 0.0
        %585 = vmatpush1.msra.mxu0 0.0
        %586 = vmatprep.subr.mxu0 0.0
        %587 = vmatpush1.msra.mxu0 0.0
        %588 = vmatprep.subr.mxu0 0.0
        %589 = vmatpush1.msra.mxu0 0.0
        %590 = vmatprep.subr.mxu0 0.0
        %591 = vmatpush1.msra.mxu0 0.0
        %592 = vmatprep.subr.mxu0 0.0
        %593 = vmatpush1.msra.mxu0 0.0
        %594 = vmatprep.subr.mxu0 0.0
        %595 = vmatpush1.msra.mxu0 0.0
        %596 = vmatprep.subr.mxu0 0.0
        %597 = vmatpush1.msra.mxu0 %v404
        %598 = vmatprep.subr.mxu0 0.0
        %599 = vmatpush2.msra.mxu0 0.0
        %600 = vmatprep.subr.mxu0 0.0
        %601 = vmatpush2.msra.mxu0 0.0
        %602 = vmatprep.subr.mxu0 0.0
        %603 = vmatpush2.msra.mxu0 0.0
        %604 = vmatprep.subr.mxu0 0.0
        %605 = vmatpush2.msra.mxu0 0.0
        %606 = vmatprep.subr.mxu0 0.0
        %607 = vmatpush2.msra.mxu0 0.0
        %608 = vmatprep.subr.mxu0 0.0
        %609 = vmatpush2.msra.mxu0 0.0
        %610 = vmatprep.subr.mxu0 0.0
        %611 = vmatpush2.msra.mxu0 0.0
        %612 = vmatprep.subr.mxu0 0.0
        %613 = vmatpush2.msra.mxu0 0.0
        %614 = vmatprep.subr.mxu0 0.0
        %615 = vmatpush2.msra.mxu0 0.0
        %616 = vmatprep.subr.mxu0 0.0
        %617 = vmatpush2.msra.mxu0 0.0
        %618 = vmatprep.subr.mxu0 0.0
        %619 = vmatpush2.msra.mxu0 0.0
        %620 = vmatprep.subr.mxu0 0.0
        %621 = vmatpush2.msra.mxu0 0.0
        %622 = vmatprep.subr.mxu0 0.0
        %623 = vmatpush2.msra.mxu0 0.0
        %624 = vmatprep.subr.mxu0 0.0
        %625 = vmatpush2.msra.mxu0 0.0
        %626 = vmatprep.subr.mxu0 0.0
        %627 = vmatpush2.msra.mxu0 0.0
        %628 = vmatprep.subr.mxu0 0.0
        %629 = vmatpush2.msra.mxu0 0.0
        %630 = vmatprep.mubr.f32.mxu0 0.0
        %631 = vmatmul.mubr.f32.gmra.mxu0 %v564
        %v632 = vpop.f32.mrf.mxu0
        %v633 = vadd.f32 %v561, %v632
        %v634 = vpop.f32.mrf.mxu0
        %635 = vdwg.mxu0
        %v636 = vmax.f32 %v633, 0.0
        %v637 = vadd.f32 %v557, %v636
        %v638 = vmax.f32 %v637, 0.0
        %640 = vset.pattern.permute.xlu0 0
        %641 = vperm.xlu0 %640, %v395
        %v642 = vpop.permute.xlu0 %641
        %v644 = vlaneseq
        %v645 = vshrl.u32 %v644, 7
        %v646 = vsub.s32 0, %v645
        %v647 = vrot.slane %v642, %v646
        %vm648 = vcmask 64512
        %v650 = vsel %vm648, %v394, 0
        %652 = vmatprep.subr.mxu0 0.0
        %653 = vmatpush1.msra.mxu0 0.0
        %654 = vmatprep.subr.mxu0 0.0
        %655 = vmatpush1.msra.mxu0 0.0
        %656 = vmatprep.subr.mxu0 0.0
        %657 = vmatpush1.msra.mxu0 0.0
        %658 = vmatprep.subr.mxu0 0.0
        %659 = vmatpush1.msra.mxu0 0.0
        %660 = vmatprep.subr.mxu0 0.0
        %661 = vmatpush1.msra.mxu0 0.0
        %662 = vmatprep.subr.mxu0 0.0
        %663 = vmatpush1.msra.mxu0 0.0
        %664 = vmatprep.subr.mxu0 0.0
        %665 = vmatpush1.msra.mxu0 0.0
        %666 = vmatprep.subr.mxu0 0.0
        %667 = vmatpush1.msra.mxu0 0.0
        %668 = vmatprep.subr.mxu0 0.0
        %669 = vmatpush1.msra.mxu0 0.0
        %670 = vmatprep.subr.mxu0 0.0
        %671 = vmatpush1.msra.mxu0 0.0
        %672 = vmatprep.subr.mxu0 0.0
        %673 = vmatpush1.msra.mxu0 0.0
        %674 = vmatprep.subr.mxu0 0.0
        %675 = vmatpush1.msra.mxu0 0.0
        %676 = vmatprep.subr.mxu0 0.0
        %677 = vmatpush1.msra.mxu0 0.0
        %678 = vmatprep.subr.mxu0 0.0
        %679 = vmatpush1.msra.mxu0 0.0
        %680 = vmatprep.subr.mxu0 0.0
        %681 = vmatpush1.msra.mxu0 0.0
        %682 = vmatprep.subr.mxu0 0.0
        %683 = vmatpush1.msra.mxu0 %v638
        %684 = vmatprep.subr.mxu0 0.0
        %685 = vmatpush2.msra.mxu0 0.0
        %686 = vmatprep.subr.mxu0 0.0
        %687 = vmatpush2.msra.mxu0 0.0
        %688 = vmatprep.subr.mxu0 0.0
        %689 = vmatpush2.msra.mxu0 0.0
        %690 = vmatprep.subr.mxu0 0.0
        %691 = vmatpush2.msra.mxu0 0.0
        %692 = vmatprep.subr.mxu0 0.0
        %693 = vmatpush2.msra.mxu0 0.0
        %694 = vmatprep.subr.mxu0 0.0
        %695 = vmatpush2.msra.mxu0 0.0
        %696 = vmatprep.subr.mxu0 0.0
        %697 = vmatpush2.msra.mxu0 0.0
        %698 = vmatprep.subr.mxu0 0.0
        %699 = vmatpush2.msra.mxu0 0.0
        %700 = vmatprep.subr.mxu0 0.0
        %701 = vmatpush2.msra.mxu0 0.0
        %702 = vmatprep.subr.mxu0 0.0
        %703 = vmatpush2.msra.mxu0 0.0
        %704 = vmatprep.subr.mxu0 0.0
        %705 = vmatpush2.msra.mxu0 0.0
        %706 = vmatprep.subr.mxu0 0.0
        %707 = vmatpush2.msra.mxu0 0.0
        %708 = vmatprep.subr.mxu0 0.0
        %709 = vmatpush2.msra.mxu0 0.0
        %710 = vmatprep.subr.mxu0 0.0
        %711 = vmatpush2.msra.mxu0 0.0
        %712 = vmatprep.subr.mxu0 0.0
        %713 = vmatpush2.msra.mxu0 0.0
        %714 = vmatprep.subr.mxu0 0.0
        %715 = vmatpush2.msra.mxu0 0.0
        %716 = vmatprep.mubr.f32.mxu0 0.0
        %717 = vmatmul.mubr.f32.gmra.mxu0 %v650
        %v718 = vpop.f32.mrf.mxu0
        %v719 = vadd.f32 %v647, %v718
        %v720 = vpop.f32.mrf.mxu0
        %721 = vdwg.mxu0
        %v722 = vxor.u32 %v719, 2147483648
        %v723 = vmul.f32 %v722, 1.442695
        %v724 = vpow.pop %v723
        %v725 = vadd.f32 %v724, 1.0
        %v726 = vrcp.pop %v725
        %v727 = vmul.f32 1.0, %v726
        %v728 = vlaneseq
        %v729 = vshrl.u32 %v728, 7
        %v730 = vsub.s32 0, %v729
        %v731 = vrot.slane %v727, %v730
        %v732 = vmul.f32 %v397, %v731
        %733 = vst [vmem:[%s372] sm:$0xf] %v732
        %s734 = sand.u32 %s250, 1
        %s735 = scalar_lea.sflag [#allocation4], %s734
        %s736 = sand.u32 %s250, 1
        %s737 = smul.addr %s736, 4
        %s738 = scalar_lea.vmem [#allocation3], %s737
        // Predicated region
        $region57: #{tpu_custom_call.1} parent=55 // pred_check
          %p739 = pneg %p260
        $region58: #{tpu_custom_call.1} parent=55 // pred_check_branch
          %741 = sbr.rel (%p739) target = $region60
        $region59: #{tpu_custom_call.1} parent=55 // pred_region
          %s743 = ssub.s32 64, 64
          %744 = vsyncadd %s735, %s743
          %s745 = smul.addr %s29, 2
          %s746 = sadd.s32 %s30, %s745
          %s747 = smul.addr %s746, 64
          %s748 = scalar_lea.hbm %s9, %s747
          %s750 = sshll.u32 %s738, 4
          %s751 = int_to_ptr.vmem [resolvable:$true] %s750
          %753 = dma.vmem_to_hbm [thread:$0]  %s751, 64, %s748, %s735
        $region60: #{tpu_custom_call.1} parent=55 // pred_fallthru
          _
      $region56: #{tpu_custom_call.1} parent=5 // pred_fallthru
        _
      %p754 = scmp.le.s32.totalorder 2, %s20
      // Predicated region
      $region61: #{tpu_custom_call.1} parent=5 // pred_check
        %p755 = pneg %p754
      $region62: #{tpu_custom_call.1} parent=5 // pred_check_branch
        %757 = sbr.rel (%p755) target = $region64
      $region63: #{tpu_custom_call.1} parent=5 // pred_region
        %s758 = ssub.s32 %s20, 2
        // Predicated region
        $region65: #{tpu_custom_call.1} parent=63 // pred_check
          %p759 = pneg %p266
        $region66: #{tpu_custom_call.1} parent=63 // pred_check_branch
          %761 = sbr.rel (%p759) target = $region68
        $region67: #{tpu_custom_call.1} parent=63 // pred_region
          %s762 = sand.u32 %s251, 1
          %s763 = scalar_lea.sflag [#allocation4], %s762
          %s764 = sand.u32 %s251, 1
          %s765 = smul.addr %s764, 4
          %s766 = scalar_lea.vmem [#allocation3], %s765
          %767 = dma.done %s763, 64
        $region68: #{tpu_custom_call.1} parent=63 // pred_fallthru
          _
      $region64: #{tpu_custom_call.1} parent=5 // pred_fallthru
        _
    $region6: #{tpu_custom_call.1} parent=1 // loop_footer
      %s24 = sadd.s32 1, %s20
    $region7: #{tpu_custom_call.1} parent=1 // loop_footer_branch
      %19 = sbr.rel target = $region3
    $region8: #{tpu_custom_call.1} parent=1 // loop_exit
      _
    %768 = vsyncpa [#allocation4], 1
    %s769 = scalar_lea.sflag [#allocation4], 1
    %770 = vsyncpa %s769, 1

</llo_original>
